<compile_context>
chip_gen: v7x
topology: tpu7x:2x2x1
jax: 0.10.0
libtpu: 0.0.40
codegen_flags: <defaults>
</compile_context>

<pallas_src>
import functools

import numpy as np
import jax
import jax.numpy as jnp
from jax.experimental import pallas as pl
from jax.experimental.pallas import tpu as pltpu

# Block working-set budget per grid step (conservative for v7x's 64 MiB VMEM;
# plenty of headroom on v5e/v6e's 128 MiB).
_VMEM_BLOCK_BUDGET = 40 * 1024 * 1024
_VMEM_LIMIT_BYTES = 64 * 1024 * 1024
_MAX_PLANES_PER_STEP = 128  # bound kernel unroll size / compile time


@functools.lru_cache(maxsize=None)
def _bilinear_weight_matrix(in_size: int, out_size: int) -> np.ndarray:
    """Row-stochastic (out_size, in_size) bilinear interpolation matrix,
    align_corners=False convention (matches F.interpolate bilinear)."""
    scale = in_size / out_size
    i = np.arange(out_size, dtype=np.float64)
    src = (i + 0.5) * scale - 0.5
    src = np.clip(src, 0.0, None)
    lo = np.floor(src).astype(np.int64)
    lo = np.minimum(lo, in_size - 1)
    hi = np.minimum(lo + 1, in_size - 1)
    frac = (src - lo).astype(np.float32)
    W = np.zeros((out_size, in_size), dtype=np.float32)
    W[np.arange(out_size), lo] += (1.0 - frac)
    W[np.arange(out_size), hi] += frac
    return W


def _block_bytes(B: int, th: int, W: int, out_hw: int, in_bytes: int) -> int:
    """Per-grid-step VMEM working set for B planes and an H-tile of th rows."""
    return (2 * B * th * W * in_bytes            # double-buffered input block
            + B * th * W * 4                     # in-kernel f32 copy
            + B * th * out_hw * 4                # column-resize intermediate
            + B * out_hw * out_hw * 4            # f32 accumulator scratch
            + 2 * B * out_hw * out_hw * in_bytes # double-buffered output block
            + 2 * 4 * (out_hw * th + W * out_hw))  # double-buffered weights


def _choose_tiling(P: int, H: int, W: int, out_hw: int, in_bytes: int):
    """Pick (planes-per-step B, H-tile th).

    th must be the full H or a divisor of H that is a multiple of 128 (Mosaic
    (8,128) block-shape constraint on the row-weight BlockSpec).  Prefers the
    biggest block that fits the VMEM budget and >= 2 plane-axis grid steps so
    both TensorCores get work.
    """
    th_cands = [H] + sorted((d for d in range(128, H, 128) if H % d == 0),
                            reverse=True)
    b_cands = [d for d in range(1, min(P, _MAX_PLANES_PER_STEP) + 1)
               if P % d == 0]
    for th in th_cands:
        fitting = [b for b in b_cands
                   if _block_bytes(b, th, W, out_hw, in_bytes)
                   <= _VMEM_BLOCK_BUDGET]
        if not fitting:
            continue
        multi_step = [b for b in fitting if P // b >= 2]
        return (max(multi_step) if multi_step else max(fitting)), th
    # Nothing fits the budget; fall back to the smallest legal block and rely
    # on the explicit vmem limit.
    return 1, th_cands[-1]


def _make_resize_kernel(B: int, th: int, W: int, out_hw: int,
                        integer_out: bool):
    def kernel(x_ref, wh_ref, wwt_ref, o_ref, acc_ref):
        # x_ref:   (B, th, W)            native input dtype (row slab)
        # wh_ref:  (out_hw, th)          f32 row-interpolation weight slab
        # wwt_ref: (W, out_hw)           f32 column-interpolation weights (T)
        # o_ref:   (B, out_hw, out_hw)   output dtype (== input dtype)
        # acc_ref: (B, out_hw, out_hw)   f32 accumulator across H-tiles
        h = pl.program_id(1)

        @pl.when(h == 0)
        def _():
            acc_ref[...] = jnp.zeros_like(acc_ref)

        x = x_ref[...].astype(jnp.float32).reshape(B * th, W)
        # Column resize, fused across all B planes (MXU M = B*th).
        tmp = jnp.dot(x, wwt_ref[...],
                      preferred_element_type=jnp.float32)        # (B*th, out_hw)
        wh = wh_ref[...]                                          # (out_hw, th)
        for b in range(B):  # static unroll; B is bounded by the VMEM budget
            acc_ref[b] += jnp.dot(wh, tmp[b * th:(b + 1) * th, :],
                                  preferred_element_type=jnp.float32)

        @pl.when(h == pl.num_programs(1) - 1)
        def _():
            res = acc_ref[...]
            if integer_out:
                res = jnp.round(res)
            o_ref[...] = res.astype(o_ref.dtype)

    return kernel


def constrained_resize(img: jax.Array, size: int) -> jax.Array:
    """img: (N, C, H, W). Returns (N, C, s, s) with s chosen as in the PyTorch
    ConstrainedResize module, in img.dtype."""
    assert img.ndim == 4
    N, C, H, W = img.shape
    max_dim = W if W >= H else H
    out_hw = size if max_dim > size else max_dim

    # Identity path: resizing a square image to its own size is a no-op.
    if out_hw == H and out_hw == W:
        return img

    P = N * C
    in_bytes = jnp.dtype(img.dtype).itemsize
    integer_out = bool(np.issubdtype(np.dtype(img.dtype), np.integer))

    # Host-side (cached) weight construction; f32 for parity with reference.
    wh = jnp.asarray(_bilinear_weight_matrix(H, out_hw))        # (out_hw, H)
    wwt = jnp.asarray(_bilinear_weight_matrix(W, out_hw).T)     # (W, out_hw)

    B, th = _choose_tiling(P, H, W, out_hw, in_bytes)
    n_h = H // th
    grid = (P // B, n_h)

    x = img.reshape(P, H, W)  # no dtype cast: kernel reads native dtype

    flops = 2 * P * (H * W * out_hw + H * out_hw * out_hw)
    bytes_accessed = (P * H * W * in_bytes
                      + P * out_hw * out_hw * in_bytes
                      + 4 * (out_hw * H + W * out_hw))

    out = pl.pallas_call(
        _make_resize_kernel(B, th, W, out_hw, integer_out),
        out_shape=jax.ShapeDtypeStruct((P, out_hw, out_hw), img.dtype),
        grid_spec=pltpu.PrefetchScalarGridSpec(
            num_scalar_prefetch=0,
            grid=grid,
            in_specs=[
                pl.BlockSpec((B, th, W), lambda i, h: (i, h, 0)),
                pl.BlockSpec((out_hw, th), lambda i, h: (0, h)),
                pl.BlockSpec((W, out_hw), lambda i, h: (0, 0)),
            ],
            out_specs=pl.BlockSpec((B, out_hw, out_hw), lambda i, h: (i, 0, 0)),
            scratch_shapes=[pltpu.VMEM((B, out_hw, out_hw), jnp.float32)],
        ),
        compiler_params=pltpu.CompilerParams(
            dimension_semantics=("parallel", "arbitrary"),
            vmem_limit_bytes=_VMEM_LIMIT_BYTES),
        cost_estimate=pl.CostEstimate(flops=flops, transcendentals=0,
                                      bytes_accessed=bytes_accessed),
    )(x, wh, wwt)

    return out.reshape(N, C, out_hw, out_hw)


def _reference_resize(img: np.ndarray, size: int) -> np.ndarray:
    """Pure-numpy reference (same bilinear-as-matmul math)."""
    _, _, H, W = img.shape
    max_dim = max(H, W)
    out_hw = size if max_dim > size else max_dim
    wh = _bilinear_weight_matrix(H, out_hw)
    ww = _bilinear_weight_matrix(W, out_hw)
    return np.einsum('oh,nchw,pw->ncop', wh, img.astype(np.float32), ww)


if __name__ == "__main__":
    key = jax.random.PRNGKey(0)
    # Small NCHW input: batch=2, channels=4, spatial=16x16; size=8 -> downscale branch.
    x = jax.random.uniform(key, (2, 4, 16, 16), dtype=jnp.float32)
    size = 8

    y = jax.block_until_ready(constrained_resize(x, size))
    assert y.shape == (2, 4, 8, 8), y.shape
    ref = _reference_resize(np.asarray(x), size)
    np.testing.assert_allclose(np.asarray(y), ref, rtol=1e-5, atol=1e-5)

    # size >= max_dim with a square input: identity short-circuit path.
    y2 = jax.block_until_ready(constrained_resize(x, 32))
    assert y2.shape == (2, 4, 16, 16), y2.shape
    np.testing.assert_allclose(np.asarray(y2), np.asarray(x), rtol=1e-5, atol=1e-5)

    # size >= max_dim with a NON-square input: resizes to (max_dim, max_dim)
    # through the kernel (B=1 path).
    x3 = jax.random.uniform(jax.random.PRNGKey(1), (1, 3, 8, 16), dtype=jnp.float32)
    y3 = jax.block_until_ready(constrained_resize(x3, 32))
    assert y3.shape == (1, 3, 16, 16), y3.shape
    ref3 = _reference_resize(np.asarray(x3), 32)
    np.testing.assert_allclose(np.asarray(y3), ref3, rtol=1e-5, atol=1e-5)

    print("KERNEL_OK")
</pallas_src>

<mosaic_0001>
module attributes {stable_mosaic.version = 11 : i64} {
  func.func @kernel(%arg0: i32, %arg1: i32, %arg2: memref<4x16x16xf32, #tpu.memory_space<vmem>>, %arg3: memref<8x16xf32, #tpu.memory_space<vmem>>, %arg4: memref<16x8xf32, #tpu.memory_space<vmem>>, %arg5: memref<4x8x8xf32, #tpu.memory_space<vmem>>, %arg6: memref<4x8x8xf32, #tpu.memory_space<vmem>>) attributes {dimension_semantics = [#tpu.dimension_semantics<parallel>, #tpu.dimension_semantics<arbitrary>], iteration_bounds = array<i64: 2, 1>, scalar_prefetch = 0 : i64, scratch_operands = 1 : i64, tpu.core_type = #tpu.core_type<tc>, window_params = [{transform_indices = @transform_0, window_bounds = array<i64: 4, 16, 16>}, {transform_indices = @transform_1, window_bounds = array<i64: 8, 16>}, {pipeline_mode = #tpu.pipeline_mode<synchronous>, transform_indices = @transform_2, window_bounds = array<i64: 16, 8>}, {transform_indices = @transform_3, window_bounds = array<i64: 4, 8, 8>}]} {
    %c0_i32 = arith.constant 0 : i32
    %0 = arith.cmpi eq, %arg1, %c0_i32 : i32
    %1 = arith.extui %0 : i1 to i32
    %c0_i32_0 = arith.constant 0 : i32
    %2 = arith.cmpi ne, %1, %c0_i32_0 : i32
    scf.if %2 {
      %cst_34 = arith.constant 0.000000e+00 : f32
      %43 = vector.broadcast %cst_34 : f32 to vector<4x8x8xf32>
      %c0_35 = arith.constant 0 : index
      %c0_36 = arith.constant 0 : index
      %c0_37 = arith.constant 0 : index
      %44 = vector.load %arg6[%c0_35, %c0_36, %c0_37] : memref<4x8x8xf32, #tpu.memory_space<vmem>>, vector<4x8x8xf32>
      tpu.vector_store %arg6[%c0_35, %c0_36, %c0_37], %43 {strides = array<i32>} : memref<4x8x8xf32, #tpu.memory_space<vmem>>, vector<4x8x8xf32>,
    } else {
    }
    %c0 = arith.constant 0 : index
    %c0_1 = arith.constant 0 : index
    %c0_2 = arith.constant 0 : index
    %3 = vector.load %arg2[%c0, %c0_1, %c0_2] : memref<4x16x16xf32, #tpu.memory_space<vmem>>, vector<4x16x16xf32>
    %4 = vector.shape_cast %3 : vector<4x16x16xf32> to vector<64x16xf32>
    %c0_3 = arith.constant 0 : index
    %c0_4 = arith.constant 0 : index
    %5 = vector.load %arg4[%c0_3, %c0_4] : memref<16x8xf32, #tpu.memory_space<vmem>>, vector<16x8xf32>
    %cst = arith.constant dense<0.000000e+00> : vector<64x8xf32>
    %6 = tpu.matmul %4, %5, %cst {dimension_numbers = #tpu.dot_dimension_numbers<[1], [0], [0], [1], [0, 0, 1, 1], [], []>} : vector<64x16xf32>, vector<16x8xf32>, vector<64x8xf32> -> vector<64x8xf32>
    %c0_5 = arith.constant 0 : index
    %c0_6 = arith.constant 0 : index
    %7 = vector.load %arg3[%c0_5, %c0_6] : memref<8x16xf32, #tpu.memory_space<vmem>>, vector<8x16xf32>
    %c0_7 = arith.constant 0 : index
    %c0_8 = arith.constant 0 : index
    %c0_9 = arith.constant 0 : index
    %8 = vector.load %arg6[%c0_7, %c0_8, %c0_9] : memref<4x8x8xf32, #tpu.memory_space<vmem>>, vector<1x8x8xf32>
    %9 = vector.shape_cast %8 : vector<1x8x8xf32> to vector<8x8xf32>
    %10 = vector.extract_strided_slice %6 {offsets = [0, 0], sizes = [16, 8], strides = [1, 1]} : vector<64x8xf32> to vector<16x8xf32>
    %cst_10 = arith.constant dense<0.000000e+00> : vector<8x8xf32>
    %11 = tpu.matmul %7, %10, %cst_10 {dimension_numbers = #tpu.dot_dimension_numbers<[1], [0], [0], [1], [0, 0, 1, 1], [], []>} : vector<8x16xf32>, vector<16x8xf32>, vector<8x8xf32> -> vector<8x8xf32>
    %12 = arith.addf %9, %11 : vector<8x8xf32>
    %c0_11 = arith.constant 0 : index
    %c0_12 = arith.constant 0 : index
    %c0_13 = arith.constant 0 : index
    %13 = vector.load %arg6[%c0_11, %c0_12, %c0_13] : memref<4x8x8xf32, #tpu.memory_space<vmem>>, vector<1x8x8xf32>
    %14 = vector.shape_cast %13 : vector<1x8x8xf32> to vector<8x8xf32>
    %15 = vector.shape_cast %12 : vector<8x8xf32> to vector<1x8x8xf32>
    tpu.vector_store %arg6[%c0_11, %c0_12, %c0_13], %15 {strides = array<i32>} : memref<4x8x8xf32, #tpu.memory_space<vmem>>, vector<1x8x8xf32>,
    %c1 = arith.constant 1 : index
    %c0_14 = arith.constant 0 : index
    %c0_15 = arith.constant 0 : index
    %16 = vector.load %arg6[%c1, %c0_14, %c0_15] : memref<4x8x8xf32, #tpu.memory_space<vmem>>, vector<1x8x8xf32>
    %17 = vector.shape_cast %16 : vector<1x8x8xf32> to vector<8x8xf32>
    %18 = vector.extract_strided_slice %6 {offsets = [16, 0], sizes = [16, 8], strides = [1, 1]} : vector<64x8xf32> to vector<16x8xf32>
    %cst_16 = arith.constant dense<0.000000e+00> : vector<8x8xf32>
    %19 = tpu.matmul %7, %18, %cst_16 {dimension_numbers = #tpu.dot_dimension_numbers<[1], [0], [0], [1], [0, 0, 1, 1], [], []>} : vector<8x16xf32>, vector<16x8xf32>, vector<8x8xf32> -> vector<8x8xf32>
    %20 = arith.addf %17, %19 : vector<8x8xf32>
    %c1_17 = arith.constant 1 : index
    %c0_18 = arith.constant 0 : index
    %c0_19 = arith.constant 0 : index
    %21 = vector.load %arg6[%c1_17, %c0_18, %c0_19] : memref<4x8x8xf32, #tpu.memory_space<vmem>>, vector<1x8x8xf32>
    %22 = vector.shape_cast %21 : vector<1x8x8xf32> to vector<8x8xf32>
    %23 = vector.shape_cast %20 : vector<8x8xf32> to vector<1x8x8xf32>
    tpu.vector_store %arg6[%c1_17, %c0_18, %c0_19], %23 {strides = array<i32>} : memref<4x8x8xf32, #tpu.memory_space<vmem>>, vector<1x8x8xf32>,
    %c2 = arith.constant 2 : index
    %c0_20 = arith.constant 0 : index
    %c0_21 = arith.constant 0 : index
    %24 = vector.load %arg6[%c2, %c0_20, %c0_21] : memref<4x8x8xf32, #tpu.memory_space<vmem>>, vector<1x8x8xf32>
    %25 = vector.shape_cast %24 : vector<1x8x8xf32> to vector<8x8xf32>
    %26 = vector.extract_strided_slice %6 {offsets = [32, 0], sizes = [16, 8], strides = [1, 1]} : vector<64x8xf32> to vector<16x8xf32>
    %cst_22 = arith.constant dense<0.000000e+00> : vector<8x8xf32>
    %27 = tpu.matmul %7, %26, %cst_22 {dimension_numbers = #tpu.dot_dimension_numbers<[1], [0], [0], [1], [0, 0, 1, 1], [], []>} : vector<8x16xf32>, vector<16x8xf32>, vector<8x8xf32> -> vector<8x8xf32>
    %28 = arith.addf %25, %27 : vector<8x8xf32>
    %c2_23 = arith.constant 2 : index
    %c0_24 = arith.constant 0 : index
    %c0_25 = arith.constant 0 : index
    %29 = vector.load %arg6[%c2_23, %c0_24, %c0_25] : memref<4x8x8xf32, #tpu.memory_space<vmem>>, vector<1x8x8xf32>
    %30 = vector.shape_cast %29 : vector<1x8x8xf32> to vector<8x8xf32>
    %31 = vector.shape_cast %28 : vector<8x8xf32> to vector<1x8x8xf32>
    tpu.vector_store %arg6[%c2_23, %c0_24, %c0_25], %31 {strides = array<i32>} : memref<4x8x8xf32, #tpu.memory_space<vmem>>, vector<1x8x8xf32>,
    %c3 = arith.constant 3 : index
    %c0_26 = arith.constant 0 : index
    %c0_27 = arith.constant 0 : index
    %32 = vector.load %arg6[%c3, %c0_26, %c0_27] : memref<4x8x8xf32, #tpu.memory_space<vmem>>, vector<1x8x8xf32>
    %33 = vector.shape_cast %32 : vector<1x8x8xf32> to vector<8x8xf32>
    %34 = vector.extract_strided_slice %6 {offsets = [48, 0], sizes = [16, 8], strides = [1, 1]} : vector<64x8xf32> to vector<16x8xf32>
    %cst_28 = arith.constant dense<0.000000e+00> : vector<8x8xf32>
    %35 = tpu.matmul %7, %34, %cst_28 {dimension_numbers = #tpu.dot_dimension_numbers<[1], [0], [0], [1], [0, 0, 1, 1], [], []>} : vector<8x16xf32>, vector<16x8xf32>, vector<8x8xf32> -> vector<8x8xf32>
    %36 = arith.addf %33, %35 : vector<8x8xf32>
    %c3_29 = arith.constant 3 : index
    %c0_30 = arith.constant 0 : index
    %c0_31 = arith.constant 0 : index
    %37 = vector.load %arg6[%c3_29, %c0_30, %c0_31] : memref<4x8x8xf32, #tpu.memory_space<vmem>>, vector<1x8x8xf32>
    %38 = vector.shape_cast %37 : vector<1x8x8xf32> to vector<8x8xf32>
    %39 = vector.shape_cast %36 : vector<8x8xf32> to vector<1x8x8xf32>
    tpu.vector_store %arg6[%c3_29, %c0_30, %c0_31], %39 {strides = array<i32>} : memref<4x8x8xf32, #tpu.memory_space<vmem>>, vector<1x8x8xf32>,
    %c0_i32_32 = arith.constant 0 : i32
    %40 = arith.cmpi eq, %arg1, %c0_i32_32 : i32
    %41 = arith.extui %40 : i1 to i32
    %c0_i32_33 = arith.constant 0 : i32
    %42 = arith.cmpi ne, %41, %c0_i32_33 : i32
    scf.if %42 {
      %c0_34 = arith.constant 0 : index
      %c0_35 = arith.constant 0 : index
      %c0_36 = arith.constant 0 : index
      %43 = vector.load %arg6[%c0_34, %c0_35, %c0_36] : memref<4x8x8xf32, #tpu.memory_space<vmem>>, vector<4x8x8xf32>
      %c0_37 = arith.constant 0 : index
      %c0_38 = arith.constant 0 : index
      %c0_39 = arith.constant 0 : index
      %44 = vector.load %arg5[%c0_37, %c0_38, %c0_39] : memref<4x8x8xf32, #tpu.memory_space<vmem>>, vector<4x8x8xf32>
      tpu.vector_store %arg5[%c0_37, %c0_38, %c0_39], %43 {strides = array<i32>} : memref<4x8x8xf32, #tpu.memory_space<vmem>>, vector<4x8x8xf32>,
    } else {
    }
    return
  }
  func.func @transform_0(%arg0: i32, %arg1: i32) -> (i32, i32, i32) {
    %c0_i32 = arith.constant 0 : i32
    %c0_i32_0 = arith.constant 0 : i32
    return %arg0, %arg1, %c0_i32 : i32, i32, i32
  }
  func.func @transform_1(%arg0: i32, %arg1: i32) -> (i32, i32) {
    %c0_i32 = arith.constant 0 : i32
    %c0_i32_0 = arith.constant 0 : i32
    return %c0_i32, %arg1 : i32, i32
  }
  func.func @transform_2(%arg0: i32, %arg1: i32) -> (i32, i32) {
    %c0_i32 = arith.constant 0 : i32
    %c0_i32_0 = arith.constant 0 : i32
    %c0_i32_1 = arith.constant 0 : i32
    return %c0_i32, %c0_i32_0 : i32, i32
  }
  func.func @transform_3(%arg0: i32, %arg1: i32) -> (i32, i32, i32) {
    %c0_i32 = arith.constant 0 : i32
    %c0_i32_0 = arith.constant 0 : i32
    %c0_i32_1 = arith.constant 0 : i32
    return %arg0, %c0_i32, %c0_i32_0 : i32, i32, i32
  }
}

</mosaic_0001>

<llo_original>
// kernel: tpu_custom_call.1
$region0: #{tpu_custom_call.1}
  #allocation0 [shape = 'u32[]', space=smem, size = 0x4, offset = 0x4, fixed_abs, tag = 'smem constant byte address 0x4 - core index']
  #allocation1 [shape = 'u32[144,128]{1,0:T(1,128)}', space=vmem, size = 0x12000, scoped, tag = 'internal scratch']
  #allocation2 [shape = 'f32[4,8,8]{2,1,0:T(8,128)}', space=vmem, size = 0x4000, scoped, tag = 'scratch operand']
  %s0 = inlined_call_operand.hbm [shape: f32[8,16,16], index: 0, kind: input, shape index: {}]
  %s1 = inlined_call_operand.hbm [shape: f32[8,16], index: 1, kind: input, shape index: {}]
  %s2 = inlined_call_operand.hbm [shape: f32[16,8], index: 2, kind: input, shape index: {}]
  %s3 = inlined_call_operand.hbm [shape: f32[8,8,8], index: 3, kind: output, shape index: {}]
  %s4 = sld [smem:[#allocation0]]
  $region65: #{tpu_custom_call.1} parent=0
    _
  %s6 = ssub.s32 1, %s4
  %s7 = scalar_select 0, %s6, %s4
  $region1: #{tpu_custom_call.1} parent=0
    #allocation3 [shape = 'u8[65536]{0}', space=vmem, size = 0x10000, scoped, tag = 'input window, operand 0']
    #allocation4 [shape = 's32[2]{0}', space=sflag, size = 0x8, scoped, tag = 'scoped memory for tpu_custom_call.1']
    #allocation5 [shape = 's32[2]{0}', space=sflag, size = 0x8, scoped, tag = 'scoped memory for tpu_custom_call.1']
    #allocation6 [shape = 'u8[4096]{0}', space=vmem, size = 0x1000, scoped, tag = 'input window, operand 1, single buffered']
    #allocation7 [shape = 's32[1]{0}', space=sflag, size = 0x4, scoped, tag = 'scoped memory for tpu_custom_call.1']
    #allocation8 [shape = 'u8[8192]{0}', space=vmem, size = 0x2000, scoped, tag = 'input window, operand 2, single buffered']
    #allocation9 [shape = 'u8[32768]{0}', space=vmem, size = 0x8000, scoped, tag = 'output window, operand 0']
    %8 = vsyncpa [#allocation4], 0
    %s9 = scalar_lea.sflag [#allocation4], 1
    %10 = vsyncpa %s9, 0
    %11 = vsyncpa [#allocation7], 0
    %12 = vsyncpa [#allocation5], 0
    %s13 = scalar_lea.sflag [#allocation5], 1
    %14 = vsyncpa %s13, 0
    loop: start=0, step=1, limit=4
    $region2: #{tpu_custom_call.1} parent=1 // loop_pre_header
      _
    $region3: #{tpu_custom_call.1} parent=1 // loop_header
      %s16 = sphi 0, %s20
      %p17 = scmp.ge.s32.totalorder %s16, 4
      %s23 = sphi 0, %s35
      %s24 = sphi 0, %s31
      %s25 = sphi 0, %s23
      %s26 = sphi 0, %s24
      %s27 = sphi 0, %s25
      %s28 = sphi 0, %s26
      %s40 = sphi 0, %s42
      %s43 = sphi 0, %s40
      %s44 = sphi 0, %s43
      %s60 = sphi 0, %s44
      %s66 = sphi 0, %s68
      %s69 = sphi 0, %s66
      %s70 = sphi 0, %s69
      %s86 = sphi 0, %s70
      %s90 = sphi 0, %s90
      %s92 = sphi 0, %s90
      %s93 = sphi 0, %s92
      %s107 = sphi 0, %s93
      %s113 = sphi 0, %s115
      %s116 = sphi 0, %s113
      %s117 = sphi 0, %s116
      %s133 = sphi 0, %s117
    $region4: #{tpu_custom_call.1} parent=1 // loop_header_branch
      %19 = sbr.rel (%p17) target = $region8
    $region5: #{tpu_custom_call.1} parent=1 // loop_body
      %s21 = ssub.s32 %s16, 1
      %s22 = ssub.s32 %s16, 2
      %s29 = sadd.s32 1, %s24
      %p30 = scmp.ge.s32.totalorder %s29, 1
      %s31 = scalar_select %p30, 0, %s29
      %s32 = sadd.s32 1, %s23
      %s33 = scalar_select %p30, %s32, %s23
      %p34 = scmp.ge.s32.totalorder %s33, 2
      %s35 = scalar_select %p34, 0, %s33
      %s36 = ssub.s32 %s23, %s35
      %s37 = ssub.s32 %s24, %s31
      %s38 = sor.u32 %s36, %s37
      %p39 = scmp.eq.s32.totalorder %s38, 0
      %s41 = sadd.s32 %s40, 1
      %s42 = scalar_select %p39, %s40, %s41
      %p45 = pneg %p39
      %p46 = scmp.eq.s32.totalorder %s16, 1
      %p47 = por %p45, %p46
      %p48 = scmp.ne.s32.totalorder %s40, %s43
      %p49 = scmp.eq.s32.totalorder %s16, 0
      %p50 = por %p48, %p49
      %p51 = scmp.ne.s32.totalorder %s40, %s43
      %p52 = scmp.eq.s32.totalorder %s21, 1
      %p53 = por %p51, %p52
      %p54 = scmp.ne.s32.totalorder %s43, %s44
      %p55 = scmp.eq.s32.totalorder %s21, 0
      %p56 = por %p54, %p55
      %p57 = scmp.ne.s32.totalorder %s43, %s44
      %p58 = scmp.eq.s32.totalorder %s22, 1
      %p59 = por %p57, %p58
      %p61 = scmp.ne.s32.totalorder %s44, %s60
      %p62 = scmp.eq.s32.totalorder %s22, 0
      %p63 = por %p61, %p62
      %s64 = ssub.s32 %s24, %s31
      %p65 = scmp.eq.s32.totalorder %s64, 0
      %s67 = sadd.s32 %s66, 1
      %s68 = scalar_select %p65, %s66, %s67
      %p71 = pneg %p65
      %p72 = scmp.eq.s32.totalorder %s16, 1
      %p73 = por %p71, %p72
      %p74 = scmp.ne.s32.totalorder %s66, %s69
      %p75 = scmp.eq.s32.totalorder %s16, 0
      %p76 = por %p74, %p75
      %p77 = scmp.ne.s32.totalorder %s66, %s69
      %p78 = scmp.eq.s32.totalorder %s21, 1
      %p79 = por %p77, %p78
      %p80 = scmp.ne.s32.totalorder %s69, %s70
      %p81 = scmp.eq.s32.totalorder %s21, 0
      %p82 = por %p80, %p81
      %p83 = scmp.ne.s32.totalorder %s69, %s70
      %p84 = scmp.eq.s32.totalorder %s22, 1
      %p85 = por %p83, %p84
      %p87 = scmp.ne.s32.totalorder %s70, %s86
      %p88 = scmp.eq.s32.totalorder %s22, 0
      %p89 = por %p87, %p88
      %s91 = sadd.s32 %s90, 1
      %p94 = scmp.eq.s32.totalorder %s16, 1
      %p95 = scmp.ne.s32.totalorder %s90, %s92
      %p96 = scmp.eq.s32.totalorder %s16, 0
      %p97 = por %p95, %p96
      %p98 = scmp.ne.s32.totalorder %s90, %s92
      %p99 = scmp.eq.s32.totalorder %s21, 1
      %p100 = por %p98, %p99
      %p101 = scmp.ne.s32.totalorder %s92, %s93
      %p102 = scmp.eq.s32.totalorder %s21, 0
      %p103 = por %p101, %p102
      %p104 = scmp.ne.s32.totalorder %s92, %s93
      %p105 = scmp.eq.s32.totalorder %s22, 1
      %p106 = por %p104, %p105
      %p108 = scmp.ne.s32.totalorder %s93, %s107
      %p109 = scmp.eq.s32.totalorder %s22, 0
      %p110 = por %p108, %p109
      %s111 = ssub.s32 %s23, %s35
      %p112 = scmp.eq.s32.totalorder %s111, 0
      %s114 = sadd.s32 %s113, 1
      %s115 = scalar_select %p112, %s113, %s114
      %p118 = pneg %p112
      %p119 = scmp.eq.s32.totalorder %s16, 1
      %p120 = por %p118, %p119
      %p121 = scmp.ne.s32.totalorder %s113, %s116
      %p122 = scmp.eq.s32.totalorder %s16, 0
      %p123 = por %p121, %p122
      %p124 = scmp.ne.s32.totalorder %s113, %s116
      %p125 = scmp.eq.s32.totalorder %s21, 1
      %p126 = por %p124, %p125
      %p127 = scmp.ne.s32.totalorder %s116, %s117
      %p128 = scmp.eq.s32.totalorder %s21, 0
      %p129 = por %p127, %p128
      %p130 = scmp.ne.s32.totalorder %s116, %s117
      %p131 = scmp.eq.s32.totalorder %s22, 1
      %p132 = por %p130, %p131
      %p134 = scmp.ne.s32.totalorder %s117, %s133
      %p135 = scmp.eq.s32.totalorder %s22, 0
      %p136 = por %p134, %p135
      %p137 = scmp.le.s32.totalorder 1, %s16
      %p138 = scmp.lt.s32.totalorder %s16, 3
      %p139 = pnand %p137, %p138
      %p140 = pneg %p139
      // Predicated region
      $region9: #{tpu_custom_call.1} parent=5 // pred_check
        _
      $region10: #{tpu_custom_call.1} parent=5 // pred_check_branch
        %142 = sbr.rel (%p139) target = $region12
      $region11: #{tpu_custom_call.1} parent=5 // pred_region
        %s143 = ssub.s32 %s16, 1
        // Predicated region
        $region13: #{tpu_custom_call.1} parent=11 // pred_check
          %p144 = pneg %p82
        $region14: #{tpu_custom_call.1} parent=11 // pred_check_branch
          %146 = sbr.rel (%p144) target = $region16
        $region15: #{tpu_custom_call.1} parent=11 // pred_region
          %s148 = ssub.s32 128, 128
          %149 = vsyncadd [#allocation7], %s148
          %s150 = smul.addr %s26, 128
          %s151 = scalar_lea.hbm %s1, %s150
          %s153 = sshll.u32 [#allocation6], 4
          %s154 = int_to_ptr.vmem [resolvable:$true] %s153
          %156 = dma.hbm_to_vmem [thread:$0]  %s151, 128, %s154, [#allocation7]
        $region16: #{tpu_custom_call.1} parent=11 // pred_fallthru
          _
        // Predicated region
        $region17: #{tpu_custom_call.1} parent=11 // pred_check
          %p157 = pneg %p103
        $region18: #{tpu_custom_call.1} parent=11 // pred_check_branch
          %159 = sbr.rel (%p157) target = $region20
        $region19: #{tpu_custom_call.1} parent=11 // pred_region
          %s161 = ssub.s32 256, 256
          %162 = vsyncadd [#allocation7], %s161
          %s163 = sshll.u32 [#allocation8], 4
          %s164 = int_to_ptr.vmem [resolvable:$true] %s163
          %169 = dma.hbm_to_vmem [thread:$0]  %s2, 256, %s164, [#allocation7], 128, 128, 8
        $region20: #{tpu_custom_call.1} parent=11 // pred_fallthru
          _
      $region12: #{tpu_custom_call.1} parent=5 // pred_fallthru
        _
      %p170 = scmp.lt.s32.totalorder %s16, 2
      // Predicated region
      $region21: #{tpu_custom_call.1} parent=5 // pred_check
        %p171 = pneg %p170
      $region22: #{tpu_custom_call.1} parent=5 // pred_check_branch
        %173 = sbr.rel (%p171) target = $region24
      $region23: #{tpu_custom_call.1} parent=5 // pred_region
        // Predicated region
        $region25: #{tpu_custom_call.1} parent=23 // pred_check
          %p174 = pneg %p50
        $region26: #{tpu_custom_call.1} parent=23 // pred_check_branch
          %176 = sbr.rel (%p174) target = $region28
        $region27: #{tpu_custom_call.1} parent=23 // pred_region
          %s177 = sand.u32 %s40, 1
          %s178 = scalar_lea.sflag [#allocation4], %s177
          %s179 = sand.u32 %s40, 1
          %s180 = smul.addr %s179, 64
          %s181 = scalar_lea.vmem [#allocation3], %s180
          %s182 = smul.u32 4, %s23
          %s183 = smul.u32 2, %s24
          %s185 = ssub.s32 1024, 1024
          %186 = vsyncadd %s178, %s185
          %s187 = smul.addr %s182, 2
          %s188 = sadd.s32 %s183, %s187
          %s189 = smul.addr %s188, 128
          %s190 = scalar_lea.hbm %s0, %s189
          %s191 = sshll.u32 %s181, 4
          %s192 = int_to_ptr.vmem [resolvable:$true] %s191
          %197 = dma.hbm_to_vmem [thread:$0]  %s190, 1024, %s192, %s178, 128, 128, 8
        $region28: #{tpu_custom_call.1} parent=23 // pred_fallthru
          _
      $region24: #{tpu_custom_call.1} parent=5 // pred_fallthru
        _
      %p198 = scmp.le.s32.totalorder 1, %s16
      %p199 = scmp.lt.s32.totalorder %s16, 3
      %p200 = pnand %p198, %p199
      %p201 = pneg %p200
      // Predicated region
      $region29: #{tpu_custom_call.1} parent=5 // pred_check
        _
      $region30: #{tpu_custom_call.1} parent=5 // pred_check_branch
        %203 = sbr.rel (%p200) target = $region32
      $region31: #{tpu_custom_call.1} parent=5 // pred_region
        %s204 = ssub.s32 %s16, 1
        %s205 = sand.u32 %s43, 1
        %s206 = scalar_lea.sflag [#allocation4], %s205
        %s207 = sand.u32 %s43, 1
        %s208 = smul.addr %s207, 64
        %s209 = scalar_lea.vmem [#allocation3], %s208
        // Predicated region
        $region33: #{tpu_custom_call.1} parent=31 // pred_check
          %p210 = pneg %p56
        $region34: #{tpu_custom_call.1} parent=31 // pred_check_branch
          %212 = sbr.rel (%p210) target = $region36
        $region35: #{tpu_custom_call.1} parent=31 // pred_region
          %213 = dma.done %s206, 1024
        $region36: #{tpu_custom_call.1} parent=31 // pred_fallthru
          _
        // Predicated region
        $region37: #{tpu_custom_call.1} parent=31 // pred_check
          %p214 = pneg %p82
        $region38: #{tpu_custom_call.1} parent=31 // pred_check_branch
          %216 = sbr.rel (%p214) target = $region40
        $region39: #{tpu_custom_call.1} parent=31 // pred_region
          %217 = dma.done [#allocation7], 128
        $region40: #{tpu_custom_call.1} parent=31 // pred_fallthru
          _
        // Predicated region
        $region41: #{tpu_custom_call.1} parent=31 // pred_check
          %p218 = pneg %p103
        $region42: #{tpu_custom_call.1} parent=31 // pred_check_branch
          %220 = sbr.rel (%p218) target = $region44
        $region43: #{tpu_custom_call.1} parent=31 // pred_region
          %221 = dma.done [#allocation7], 256
        $region44: #{tpu_custom_call.1} parent=31 // pred_fallthru
          _
        %s222 = sand.u32 %s43, 1
        %s223 = scalar_lea.sflag [#allocation4], %s222
        %s224 = sand.u32 %s43, 1
        %s225 = smul.addr %s224, 64
        %s226 = scalar_lea.vmem [#allocation3], %s225
        %p227 = pneg %p56
        %p228 = pneg %p53
        %p229 = pneg %p82
        %p230 = pneg %p79
        %p231 = pneg %p103
        %p232 = pneg %p100
        %p233 = pneg %p129
        %p234 = pneg %p126
        %s235 = sand.u32 %s116, 1
        %s236 = scalar_lea.sflag [#allocation5], %s235
        %s237 = sand.u32 %s116, 1
        %s238 = smul.addr %s237, 32
        %s239 = scalar_lea.vmem [#allocation9], %s238
        %s240 = smul.u32 4, %s25
        %s241 = smul.u32 2, %s26
        %s242 = smul.u32 4, %s25
        %p243 = scmp.eq.s32.totalorder %s26, 0
        // Predicated region
        $region45: #{tpu_custom_call.1} parent=31 // pred_check
          %p244 = pneg %p243
        $region46: #{tpu_custom_call.1} parent=31 // pred_check_branch
          %246 = sbr.rel (%p244) target = $region48
        $region47: #{tpu_custom_call.1} parent=31 // pred_region
          %vm247 = vcmask 64512
          %248 = vst.msk [vmem:[#allocation2] sm:$0xff] %vm247, 0.0
          %249 = vst.msk [vmem:[#allocation2 + $0x8] sm:$0xff] %vm247, 0.0
          %250 = vst.msk [vmem:[#allocation2 + $0x10] sm:$0xff] %vm247, 0.0
          %251 = vst.msk [vmem:[#allocation2 + $0x18] sm:$0xff] %vm247, 0.0
        $region48: #{tpu_custom_call.1} parent=31 // pred_fallthru
          _
        %v252 = vld [vmem:[%s209] sm:$0xff]
        %v253 = vld [vmem:[%s209 + $0x8] sm:$0xff]
        %v254 = vld [vmem:[%s209 + $0x10] sm:$0xff]
        %v255 = vld [vmem:[%s209 + $0x18] sm:$0xff]
        %v256 = vld [vmem:[%s209 + $0x20] sm:$0xff]
        %v257 = vld [vmem:[%s209 + $0x28] sm:$0xff]
        %v258 = vld [vmem:[%s209 + $0x30] sm:$0xff]
        %v259 = vld [vmem:[%s209 + $0x38] sm:$0xff]
        %v260 = vld [vmem:[#allocation8] sm:$0xff]
        %v261 = vld [vmem:[#allocation8 + $0x8] sm:$0xff]
        %vm262 = vcmask 130048
        %v264 = vsel %vm262, %v252, 0
        %v267 = vsel %vm262, %v253, 0
        %v270 = vsel %vm262, %v254, 0
        %v273 = vsel %vm262, %v255, 0
        %v276 = vsel %vm262, %v256, 0
        %v279 = vsel %vm262, %v257, 0
        %v282 = vsel %vm262, %v258, 0
        %v285 = vsel %vm262, %v259, 0
        %287 = vmatprep.subr.mxu0 0.0
        %288 = vmatpush1.msra.mxu0 %v260
        %289 = vmatprep.subr.mxu0 0.0
        %290 = vmatpush1.msra.mxu0 %v261
        %291 = vmatprep.subr.mxu0 0.0
        %292 = vmatpush1.msra.mxu0 0.0
        %293 = vmatprep.subr.mxu0 0.0
        %294 = vmatpush1.msra.mxu0 0.0
        %295 = vmatprep.subr.mxu0 0.0
        %296 = vmatpush1.msra.mxu0 0.0
        %297 = vmatprep.subr.mxu0 0.0
        %298 = vmatpush1.msra.mxu0 0.0
        %299 = vmatprep.subr.mxu0 0.0
        %300 = vmatpush1.msra.mxu0 0.0
        %301 = vmatprep.subr.mxu0 0.0
        %302 = vmatpush1.msra.mxu0 0.0
        %303 = vmatprep.subr.mxu0 0.0
        %304 = vmatpush1.msra.mxu0 0.0
        %305 = vmatprep.subr.mxu0 0.0
        %306 = vmatpush1.msra.mxu0 0.0
        %307 = vmatprep.subr.mxu0 0.0
        %308 = vmatpush1.msra.mxu0 0.0
        %309 = vmatprep.subr.mxu0 0.0
        %310 = vmatpush1.msra.mxu0 0.0
        %311 = vmatprep.subr.mxu0 0.0
        %312 = vmatpush1.msra.mxu0 0.0
        %313 = vmatprep.subr.mxu0 0.0
        %314 = vmatpush1.msra.mxu0 0.0
        %315 = vmatprep.subr.mxu0 0.0
        %316 = vmatpush1.msra.mxu0 0.0
        %317 = vmatprep.subr.mxu0 0.0
        %318 = vmatpush1.msra.mxu0 0.0
        %319 = vmatprep.subr.mxu0 0.0
        %320 = vmatpush1.msra.mxu0 0.0
        %321 = vmatprep.subr.mxu0 0.0
        %322 = vmatpush1.msra.mxu0 0.0
        %323 = vmatprep.subr.mxu0 0.0
        %324 = vmatpush1.msra.mxu0 0.0
        %325 = vmatprep.subr.mxu0 0.0
        %326 = vmatpush1.msra.mxu0 0.0
        %327 = vmatprep.subr.mxu0 0.0
        %328 = vmatpush1.msra.mxu0 0.0
        %329 = vmatprep.subr.mxu0 0.0
        %330 = vmatpush1.msra.mxu0 0.0
        %331 = vmatprep.subr.mxu0 0.0
        %332 = vmatpush1.msra.mxu0 0.0
        %333 = vmatprep.subr.mxu0 0.0
        %334 = vmatpush1.msra.mxu0 0.0
        %335 = vmatprep.subr.mxu0 0.0
        %336 = vmatpush1.msra.mxu0 0.0
        %337 = vmatprep.subr.mxu0 0.0
        %338 = vmatpush1.msra.mxu0 0.0
        %339 = vmatprep.subr.mxu0 0.0
        %340 = vmatpush1.msra.mxu0 0.0
        %341 = vmatprep.subr.mxu0 0.0
        %342 = vmatpush1.msra.mxu0 0.0
        %343 = vmatprep.subr.mxu0 0.0
        %344 = vmatpush1.msra.mxu0 0.0
        %345 = vmatprep.subr.mxu0 0.0
        %346 = vmatpush1.msra.mxu0 0.0
        %347 = vmatprep.subr.mxu0 0.0
        %348 = vmatpush1.msra.mxu0 0.0
        %349 = vmatprep.subr.mxu0 0.0
        %350 = vmatpush1.msra.mxu0 0.0
        %351 = vmatprep.mubr.f32.mxu0 0.0
        %352 = vmatmul.mubr.f32.gmra.mrb[0].mxu0 %v264
        %v353 = vpop.f32.mrb[0].mxu0
        %v354 = vadd.f32 0.0, %v353
        %v355 = vpop.f32.mrb[0].mxu0
        %356 = vmatprep.mubr.f32.mxu0 0.0
        %357 = vmatmul.mubr.f32.gmra.mrb[0].mxu0 %v267
        %v358 = vpop.f32.mrb[0].mxu0
        %v359 = vadd.f32 0.0, %v358
        %v360 = vpop.f32.mrb[0].mxu0
        %361 = vmatprep.mubr.f32.mxu0 0.0
        %362 = vmatmul.mubr.f32.gmra.mrb[0].mxu0 %v270
        %v363 = vpop.f32.mrb[0].mxu0
        %v364 = vadd.f32 0.0, %v363
        %v365 = vpop.f32.mrb[0].mxu0
        %366 = vmatprep.mubr.f32.mxu0 0.0
        %367 = vmatmul.mubr.f32.gmra.mrb[0].mxu0 %v273
        %v368 = vpop.f32.mrb[0].mxu0
        %v369 = vadd.f32 0.0, %v368
        %v370 = vpop.f32.mrb[0].mxu0
        %371 = vmatprep.mubr.f32.mxu0 0.0
        %372 = vmatmul.mubr.f32.gmra.mrb[0].mxu0 %v276
        %v373 = vpop.f32.mrb[0].mxu0
        %v374 = vadd.f32 0.0, %v373
        %v375 = vpop.f32.mrb[0].mxu0
        %376 = vmatprep.mubr.f32.mxu0 0.0
        %377 = vmatmul.mubr.f32.gmra.mrb[0].mxu0 %v279
        %v378 = vpop.f32.mrb[0].mxu0
        %v379 = vadd.f32 0.0, %v378
        %v380 = vpop.f32.mrb[0].mxu0
        %381 = vmatprep.mubr.f32.mxu0 0.0
        %382 = vmatmul.mubr.f32.gmra.mrb[0].mxu0 %v282
        %v383 = vpop.f32.mrb[0].mxu0
        %v384 = vadd.f32 0.0, %v383
        %v385 = vpop.f32.mrb[0].mxu0
        %386 = vmatprep.mubr.f32.mxu0 0.0
        %387 = vmatmul.mubr.f32.gmra.mrb[0].mxu0 %v285
        %v388 = vpop.f32.mrb[0].mxu0
        %v389 = vadd.f32 0.0, %v388
        %v390 = vpop.f32.mrb[0].mxu0
        %391 = vdwg.mxu0
        %v392 = vld [vmem:[#allocation6] sm:$0xff]
        %v393 = vld [vmem:[#allocation2] sm:$0xff]
        %v395 = vsel %vm262, %v392, 0
        %397 = vmatprep.subr.mxu0 0.0
        %398 = vmatpush1.msra.mxu0 %v354
        %399 = vmatprep.subr.mxu0 0.0
        %400 = vmatpush1.msra.mxu0 %v359
        %401 = vmatprep.subr.mxu0 0.0
        %402 = vmatpush1.msra.mxu0 0.0
        %403 = vmatprep.subr.mxu0 0.0
        %404 = vmatpush1.msra.mxu0 0.0
        %405 = vmatprep.subr.mxu0 0.0
        %406 = vmatpush1.msra.mxu0 0.0
        %407 = vmatprep.subr.mxu0 0.0
        %408 = vmatpush1.msra.mxu0 0.0
        %409 = vmatprep.subr.mxu0 0.0
        %410 = vmatpush1.msra.mxu0 0.0
        %411 = vmatprep.subr.mxu0 0.0
        %412 = vmatpush1.msra.mxu0 0.0
        %413 = vmatprep.subr.mxu0 0.0
        %414 = vmatpush1.msra.mxu0 0.0
        %415 = vmatprep.subr.mxu0 0.0
        %416 = vmatpush1.msra.mxu0 0.0
        %417 = vmatprep.subr.mxu0 0.0
        %418 = vmatpush1.msra.mxu0 0.0
        %419 = vmatprep.subr.mxu0 0.0
        %420 = vmatpush1.msra.mxu0 0.0
        %421 = vmatprep.subr.mxu0 0.0
        %422 = vmatpush1.msra.mxu0 0.0
        %423 = vmatprep.subr.mxu0 0.0
        %424 = vmatpush1.msra.mxu0 0.0
        %425 = vmatprep.subr.mxu0 0.0
        %426 = vmatpush1.msra.mxu0 0.0
        %427 = vmatprep.subr.mxu0 0.0
        %428 = vmatpush1.msra.mxu0 0.0
        %429 = vmatprep.subr.mxu0 0.0
        %430 = vmatpush1.msra.mxu0 0.0
        %431 = vmatprep.subr.mxu0 0.0
        %432 = vmatpush1.msra.mxu0 0.0
        %433 = vmatprep.subr.mxu0 0.0
        %434 = vmatpush1.msra.mxu0 0.0
        %435 = vmatprep.subr.mxu0 0.0
        %436 = vmatpush1.msra.mxu0 0.0
        %437 = vmatprep.subr.mxu0 0.0
        %438 = vmatpush1.msra.mxu0 0.0
        %439 = vmatprep.subr.mxu0 0.0
        %440 = vmatpush1.msra.mxu0 0.0
        %441 = vmatprep.subr.mxu0 0.0
        %442 = vmatpush1.msra.mxu0 0.0
        %443 = vmatprep.subr.mxu0 0.0
        %444 = vmatpush1.msra.mxu0 0.0
        %445 = vmatprep.subr.mxu0 0.0
        %446 = vmatpush1.msra.mxu0 0.0
        %447 = vmatprep.subr.mxu0 0.0
        %448 = vmatpush1.msra.mxu0 0.0
        %449 = vmatprep.subr.mxu0 0.0
        %450 = vmatpush1.msra.mxu0 0.0
        %451 = vmatprep.subr.mxu0 0.0
        %452 = vmatpush1.msra.mxu0 0.0
        %453 = vmatprep.subr.mxu0 0.0
        %454 = vmatpush1.msra.mxu0 0.0
        %455 = vmatprep.subr.mxu0 0.0
        %456 = vmatpush1.msra.mxu0 0.0
        %457 = vmatprep.subr.mxu0 0.0
        %458 = vmatpush1.msra.mxu0 0.0
        %459 = vmatprep.subr.mxu0 0.0
        %460 = vmatpush1.msra.mxu0 0.0
        %461 = vmatprep.mubr.f32.mxu0 0.0
        %462 = vmatmul.mubr.f32.gmra.mrb[0].mxu0 %v395
        %v463 = vpop.f32.mrb[0].mxu0
        %v464 = vadd.f32 0.0, %v463
        %v465 = vpop.f32.mrb[0].mxu0
        %466 = vdwg.mxu0
        %v467 = vadd.f32 %v393, %v464
        %vm468 = vcmask 64512
        %469 = vst.msk [vmem:[#allocation2] sm:$0xff] %vm468, %v467
        %s470 = scalar_lea.vmem [#allocation2], 8
        %v471 = vld [vmem:[%s470] sm:$0xff]
        %472 = vmatprep.subr.mxu0 0.0
        %473 = vmatpush1.msra.mxu0 %v364
        %474 = vmatprep.subr.mxu0 0.0
        %475 = vmatpush1.msra.mxu0 %v369
        %476 = vmatprep.subr.mxu0 0.0
        %477 = vmatpush1.msra.mxu0 0.0
        %478 = vmatprep.subr.mxu0 0.0
        %479 = vmatpush1.msra.mxu0 0.0
        %480 = vmatprep.subr.mxu0 0.0
        %481 = vmatpush1.msra.mxu0 0.0
        %482 = vmatprep.subr.mxu0 0.0
        %483 = vmatpush1.msra.mxu0 0.0
        %484 = vmatprep.subr.mxu0 0.0
        %485 = vmatpush1.msra.mxu0 0.0
        %486 = vmatprep.subr.mxu0 0.0
        %487 = vmatpush1.msra.mxu0 0.0
        %488 = vmatprep.subr.mxu0 0.0
        %489 = vmatpush1.msra.mxu0 0.0
        %490 = vmatprep.subr.mxu0 0.0
        %491 = vmatpush1.msra.mxu0 0.0
        %492 = vmatprep.subr.mxu0 0.0
        %493 = vmatpush1.msra.mxu0 0.0
        %494 = vmatprep.subr.mxu0 0.0
        %495 = vmatpush1.msra.mxu0 0.0
        %496 = vmatprep.subr.mxu0 0.0
        %497 = vmatpush1.msra.mxu0 0.0
        %498 = vmatprep.subr.mxu0 0.0
        %499 = vmatpush1.msra.mxu0 0.0
        %500 = vmatprep.subr.mxu0 0.0
        %501 = vmatpush1.msra.mxu0 0.0
        %502 = vmatprep.subr.mxu0 0.0
        %503 = vmatpush1.msra.mxu0 0.0
        %504 = vmatprep.subr.mxu0 0.0
        %505 = vmatpush1.msra.mxu0 0.0
        %506 = vmatprep.subr.mxu0 0.0
        %507 = vmatpush1.msra.mxu0 0.0
        %508 = vmatprep.subr.mxu0 0.0
        %509 = vmatpush1.msra.mxu0 0.0
        %510 = vmatprep.subr.mxu0 0.0
        %511 = vmatpush1.msra.mxu0 0.0
        %512 = vmatprep.subr.mxu0 0.0
        %513 = vmatpush1.msra.mxu0 0.0
        %514 = vmatprep.subr.mxu0 0.0
        %515 = vmatpush1.msra.mxu0 0.0
        %516 = vmatprep.subr.mxu0 0.0
        %517 = vmatpush1.msra.mxu0 0.0
        %518 = vmatprep.subr.mxu0 0.0
        %519 = vmatpush1.msra.mxu0 0.0
        %520 = vmatprep.subr.mxu0 0.0
        %521 = vmatpush1.msra.mxu0 0.0
        %522 = vmatprep.subr.mxu0 0.0
        %523 = vmatpush1.msra.mxu0 0.0
        %524 = vmatprep.subr.mxu0 0.0
        %525 = vmatpush1.msra.mxu0 0.0
        %526 = vmatprep.subr.mxu0 0.0
        %527 = vmatpush1.msra.mxu0 0.0
        %528 = vmatprep.subr.mxu0 0.0
        %529 = vmatpush1.msra.mxu0 0.0
        %530 = vmatprep.subr.mxu0 0.0
        %531 = vmatpush1.msra.mxu0 0.0
        %532 = vmatprep.subr.mxu0 0.0
        %533 = vmatpush1.msra.mxu0 0.0
        %534 = vmatprep.subr.mxu0 0.0
        %535 = vmatpush1.msra.mxu0 0.0
        %536 = vmatprep.mubr.f32.mxu0 0.0
        %537 = vmatmul.mubr.f32.gmra.mrb[0].mxu0 %v395
        %v538 = vpop.f32.mrb[0].mxu0
        %v539 = vadd.f32 0.0, %v538
        %v540 = vpop.f32.mrb[0].mxu0
        %541 = vdwg.mxu0
        %v542 = vadd.f32 %v471, %v539
        %543 = vst.msk [vmem:[%s470] sm:$0xff] %vm468, %v542
        %s544 = scalar_lea.vmem [#allocation2], 16
        %v545 = vld [vmem:[%s544] sm:$0xff]
        %546 = vmatprep.subr.mxu0 0.0
        %547 = vmatpush1.msra.mxu0 %v374
        %548 = vmatprep.subr.mxu0 0.0
        %549 = vmatpush1.msra.mxu0 %v379
        %550 = vmatprep.subr.mxu0 0.0
        %551 = vmatpush1.msra.mxu0 0.0
        %552 = vmatprep.subr.mxu0 0.0
        %553 = vmatpush1.msra.mxu0 0.0
        %554 = vmatprep.subr.mxu0 0.0
        %555 = vmatpush1.msra.mxu0 0.0
        %556 = vmatprep.subr.mxu0 0.0
        %557 = vmatpush1.msra.mxu0 0.0
        %558 = vmatprep.subr.mxu0 0.0
        %559 = vmatpush1.msra.mxu0 0.0
        %560 = vmatprep.subr.mxu0 0.0
        %561 = vmatpush1.msra.mxu0 0.0
        %562 = vmatprep.subr.mxu0 0.0
        %563 = vmatpush1.msra.mxu0 0.0
        %564 = vmatprep.subr.mxu0 0.0
        %565 = vmatpush1.msra.mxu0 0.0
        %566 = vmatprep.subr.mxu0 0.0
        %567 = vmatpush1.msra.mxu0 0.0
        %568 = vmatprep.subr.mxu0 0.0
        %569 = vmatpush1.msra.mxu0 0.0
        %570 = vmatprep.subr.mxu0 0.0
        %571 = vmatpush1.msra.mxu0 0.0
        %572 = vmatprep.subr.mxu0 0.0
        %573 = vmatpush1.msra.mxu0 0.0
        %574 = vmatprep.subr.mxu0 0.0
        %575 = vmatpush1.msra.mxu0 0.0
        %576 = vmatprep.subr.mxu0 0.0
        %577 = vmatpush1.msra.mxu0 0.0
        %578 = vmatprep.subr.mxu0 0.0
        %579 = vmatpush1.msra.mxu0 0.0
        %580 = vmatprep.subr.mxu0 0.0
        %581 = vmatpush1.msra.mxu0 0.0
        %582 = vmatprep.subr.mxu0 0.0
        %583 = vmatpush1.msra.mxu0 0.0
        %584 = vmatprep.subr.mxu0 0.0
        %585 = vmatpush1.msra.mxu0 0.0
        %586 = vmatprep.subr.mxu0 0.0
        %587 = vmatpush1.msra.mxu0 0.0
        %588 = vmatprep.subr.mxu0 0.0
        %589 = vmatpush1.msra.mxu0 0.0
        %590 = vmatprep.subr.mxu0 0.0
        %591 = vmatpush1.msra.mxu0 0.0
        %592 = vmatprep.subr.mxu0 0.0
        %593 = vmatpush1.msra.mxu0 0.0
        %594 = vmatprep.subr.mxu0 0.0
        %595 = vmatpush1.msra.mxu0 0.0
        %596 = vmatprep.subr.mxu0 0.0
        %597 = vmatpush1.msra.mxu0 0.0
        %598 = vmatprep.subr.mxu0 0.0
        %599 = vmatpush1.msra.mxu0 0.0
        %600 = vmatprep.subr.mxu0 0.0
        %601 = vmatpush1.msra.mxu0 0.0
        %602 = vmatprep.subr.mxu0 0.0
        %603 = vmatpush1.msra.mxu0 0.0
        %604 = vmatprep.subr.mxu0 0.0
        %605 = vmatpush1.msra.mxu0 0.0
        %606 = vmatprep.subr.mxu0 0.0
        %607 = vmatpush1.msra.mxu0 0.0
        %608 = vmatprep.subr.mxu0 0.0
        %609 = vmatpush1.msra.mxu0 0.0
        %610 = vmatprep.mubr.f32.mxu0 0.0
        %611 = vmatmul.mubr.f32.gmra.mrb[0].mxu0 %v395
        %v612 = vpop.f32.mrb[0].mxu0
        %v613 = vadd.f32 0.0, %v612
        %v614 = vpop.f32.mrb[0].mxu0
        %615 = vdwg.mxu0
        %v616 = vadd.f32 %v545, %v613
        %617 = vst.msk [vmem:[%s544] sm:$0xff] %vm468, %v616
        %s618 = scalar_lea.vmem [#allocation2], 24
        %v619 = vld [vmem:[%s618] sm:$0xff]
        %620 = vmatprep.subr.mxu0 0.0
        %621 = vmatpush1.msra.mxu0 %v384
        %622 = vmatprep.subr.mxu0 0.0
        %623 = vmatpush1.msra.mxu0 %v389
        %624 = vmatprep.subr.mxu0 0.0
        %625 = vmatpush1.msra.mxu0 0.0
        %626 = vmatprep.subr.mxu0 0.0
        %627 = vmatpush1.msra.mxu0 0.0
        %628 = vmatprep.subr.mxu0 0.0
        %629 = vmatpush1.msra.mxu0 0.0
        %630 = vmatprep.subr.mxu0 0.0
        %631 = vmatpush1.msra.mxu0 0.0
        %632 = vmatprep.subr.mxu0 0.0
        %633 = vmatpush1.msra.mxu0 0.0
        %634 = vmatprep.subr.mxu0 0.0
        %635 = vmatpush1.msra.mxu0 0.0
        %636 = vmatprep.subr.mxu0 0.0
        %637 = vmatpush1.msra.mxu0 0.0
        %638 = vmatprep.subr.mxu0 0.0
        %639 = vmatpush1.msra.mxu0 0.0
        %640 = vmatprep.subr.mxu0 0.0
        %641 = vmatpush1.msra.mxu0 0.0
        %642 = vmatprep.subr.mxu0 0.0
        %643 = vmatpush1.msra.mxu0 0.0
        %644 = vmatprep.subr.mxu0 0.0
        %645 = vmatpush1.msra.mxu0 0.0
        %646 = vmatprep.subr.mxu0 0.0
        %647 = vmatpush1.msra.mxu0 0.0
        %648 = vmatprep.subr.mxu0 0.0
        %649 = vmatpush1.msra.mxu0 0.0
        %650 = vmatprep.subr.mxu0 0.0
        %651 = vmatpush1.msra.mxu0 0.0
        %652 = vmatprep.subr.mxu0 0.0
        %653 = vmatpush1.msra.mxu0 0.0
        %654 = vmatprep.subr.mxu0 0.0
        %655 = vmatpush1.msra.mxu0 0.0
        %656 = vmatprep.subr.mxu0 0.0
        %657 = vmatpush1.msra.mxu0 0.0
        %658 = vmatprep.subr.mxu0 0.0
        %659 = vmatpush1.msra.mxu0 0.0
        %660 = vmatprep.subr.mxu0 0.0
        %661 = vmatpush1.msra.mxu0 0.0
        %662 = vmatprep.subr.mxu0 0.0
        %663 = vmatpush1.msra.mxu0 0.0
        %664 = vmatprep.subr.mxu0 0.0
        %665 = vmatpush1.msra.mxu0 0.0
        %666 = vmatprep.subr.mxu0 0.0
        %667 = vmatpush1.msra.mxu0 0.0
        %668 = vmatprep.subr.mxu0 0.0
        %669 = vmatpush1.msra.mxu0 0.0
        %670 = vmatprep.subr.mxu0 0.0
        %671 = vmatpush1.msra.mxu0 0.0
        %672 = vmatprep.subr.mxu0 0.0
        %673 = vmatpush1.msra.mxu0 0.0
        %674 = vmatprep.subr.mxu0 0.0
        %675 = vmatpush1.msra.mxu0 0.0
        %676 = vmatprep.subr.mxu0 0.0
        %677 = vmatpush1.msra.mxu0 0.0
        %678 = vmatprep.subr.mxu0 0.0
        %679 = vmatpush1.msra.mxu0 0.0
        %680 = vmatprep.subr.mxu0 0.0
        %681 = vmatpush1.msra.mxu0 0.0
        %682 = vmatprep.subr.mxu0 0.0
        %683 = vmatpush1.msra.mxu0 0.0
        %684 = vmatprep.mubr.f32.mxu0 0.0
        %685 = vmatmul.mubr.f32.gmra.mrb[0].mxu0 %v395
        %v686 = vpop.f32.mrb[0].mxu0
        %v687 = vadd.f32 0.0, %v686
        %v688 = vpop.f32.mrb[0].mxu0
        %689 = vdwg.mxu0
        %v690 = vadd.f32 %v619, %v687
        %691 = vst.msk [vmem:[%s618] sm:$0xff] %vm468, %v690
        // Predicated region
        $region49: #{tpu_custom_call.1} parent=31 // pred_check
          %p692 = pneg %p243
        $region50: #{tpu_custom_call.1} parent=31 // pred_check_branch
          %694 = sbr.rel (%p692) target = $region52
        $region51: #{tpu_custom_call.1} parent=31 // pred_region
          %v695 = vld [vmem:[#allocation2] sm:$0xff]
          %v696 = vld [vmem:[#allocation2 + $0x8] sm:$0xff]
          %v697 = vld [vmem:[#allocation2 + $0x10] sm:$0xff]
          %v698 = vld [vmem:[#allocation2 + $0x18] sm:$0xff]
          %699 = vst.msk [vmem:[%s239] sm:$0xff] %vm468, %v695
          %700 = vst.msk [vmem:[%s239 + $0x8] sm:$0xff] %vm468, %v696
          %701 = vst.msk [vmem:[%s239 + $0x10] sm:$0xff] %vm468, %v697
          %702 = vst.msk [vmem:[%s239 + $0x18] sm:$0xff] %vm468, %v698
        $region52: #{tpu_custom_call.1} parent=31 // pred_fallthru
          _
        %s703 = sand.u32 %s116, 1
        %s704 = scalar_lea.sflag [#allocation5], %s703
        %s705 = sand.u32 %s116, 1
        %s706 = smul.addr %s705, 32
        %s707 = scalar_lea.vmem [#allocation9], %s706
        // Predicated region
        $region53: #{tpu_custom_call.1} parent=31 // pred_check
          %p708 = pneg %p126
        $region54: #{tpu_custom_call.1} parent=31 // pred_check_branch
          %710 = sbr.rel (%p708) target = $region56
        $region55: #{tpu_custom_call.1} parent=31 // pred_region
          %s711 = smul.u32 4, %s25
          %s713 = ssub.s32 512, 512
          %714 = vsyncadd %s704, %s713
          %s715 = smul.addr %s711, 128
          %s716 = scalar_lea.hbm %s3, %s715
          %s717 = sshll.u32 %s707, 4
          %s718 = int_to_ptr.vmem [resolvable:$true] %s717
          %723 = dma.vmem_to_hbm [thread:$0]  %s718, 512, %s716, %s704, 128, 128, 8
        $region56: #{tpu_custom_call.1} parent=31 // pred_fallthru
          _
      $region32: #{tpu_custom_call.1} parent=5 // pred_fallthru
        _
      %p724 = scmp.le.s32.totalorder 2, %s16
      // Predicated region
      $region57: #{tpu_custom_call.1} parent=5 // pred_check
        %p725 = pneg %p724
      $region58: #{tpu_custom_call.1} parent=5 // pred_check_branch
        %727 = sbr.rel (%p725) target = $region60
      $region59: #{tpu_custom_call.1} parent=5 // pred_region
        %s728 = ssub.s32 %s16, 2
        // Predicated region
        $region61: #{tpu_custom_call.1} parent=59 // pred_check
          %p729 = pneg %p132
        $region62: #{tpu_custom_call.1} parent=59 // pred_check_branch
          %731 = sbr.rel (%p729) target = $region64
        $region63: #{tpu_custom_call.1} parent=59 // pred_region
          %s732 = sand.u32 %s117, 1
          %s733 = scalar_lea.sflag [#allocation5], %s732
          %s734 = sand.u32 %s117, 1
          %s735 = smul.addr %s734, 32
          %s736 = scalar_lea.vmem [#allocation9], %s735
          %737 = dma.done %s733, 512
        $region64: #{tpu_custom_call.1} parent=59 // pred_fallthru
          _
      $region60: #{tpu_custom_call.1} parent=5 // pred_fallthru
        _
    $region6: #{tpu_custom_call.1} parent=1 // loop_footer
      %s20 = sadd.s32 1, %s16
    $region7: #{tpu_custom_call.1} parent=1 // loop_footer_branch
      %15 = sbr.rel target = $region3
    $region8: #{tpu_custom_call.1} parent=1 // loop_exit
      _
    %738 = vsyncpa [#allocation4], 1
    %s739 = scalar_lea.sflag [#allocation4], 1
    %740 = vsyncpa %s739, 1
    %741 = vsyncpa [#allocation7], 1
    %742 = vsyncpa [#allocation5], 1
    %s743 = scalar_lea.sflag [#allocation5], 1
    %744 = vsyncpa %s743, 1

</llo_original>
